<compile_context>
chip_gen: v6e
topology: v6e:2x2x1
jax: 0.10.0
libtpu: 0.0.40
codegen_flags: <defaults>
</compile_context>

<pallas_src>
import jax
import jax.numpy as jnp
from jax.experimental import pallas as pl
from jax.experimental.pallas import tpu as pltpu


def _round_up(x, m):
    return ((x + m - 1) // m) * m


# ---------------------------------------------------------------------------
# Fused kernel: multi-hot labels + per-block class-freq partial sums + mask
# ---------------------------------------------------------------------------
def fused_encode_kernel(proto_ref, len_ref, labels_ref, freq_ref, mask_ref):
    tn, lpad = labels_ref.shape
    tpad = mask_ref.shape[1]

    # ---- multi-hot labels (one_hot_encoder + np.clip(ps, 0, 1)) ----
    proto = proto_ref[...]                                   # (tn, P) int32, -1 = pad
    lane_ids = jax.lax.broadcasted_iota(jnp.int32, (tn, lpad), 1)

    # Boolean OR chain over the (small, static) protocol slots: a single fused
    # elementwise pass instead of P f32 read+write accumulator passes + clip.
    # These compares are free filler on the VPU under a store-bound kernel.
    hits = proto[:, 0:1] == lane_ids
    for p in range(1, proto.shape[1]):
        hits = jnp.logical_or(hits, proto[:, p:p + 1] == lane_ids)

    labels_ref[...] = hits.astype(jnp.int8)                  # exact 0/1

    # ---- class_freq partial sum for this block (reduced outside kernel) ----
    freq_ref[...] = jnp.sum(hits.astype(jnp.float32), axis=0, keepdims=True)[None]

    # ---- attention mask (text2inp: [0]*length + [1]*(max_len-length)) ----
    t = jax.lax.broadcasted_iota(jnp.int32, (tn, tpad), 1)
    mask_ref[...] = (t >= len_ref[...]).astype(jnp.int8)     # (tn, 1) length broadcast


# ---------------------------------------------------------------------------
# Pipeline wrapper (forward-pass analogue: encode_label + __statistics_dataset
# label counting + dataset tensorization of masks) — ONE pallas_call total.
# ---------------------------------------------------------------------------
def ems_data_pipeline(proto_ids_splits, lengths_splits, n_labels, max_len,
                      *, tile_n=1024):
    names = ("train", "val", "test")

    Lpad = _round_up(max(n_labels, 1), 128)       # lane-dense label slab
    Tpad = _round_up(max(max_len, 1), 128)        # lane-dense mask slab

    # Common protocol-slot width across splits (pad extra slots with -1).
    P = max(int(proto_ids_splits[n].shape[1]) for n in names)

    # Row tile: large for streaming efficiency, clamped for small splits, kept
    # a multiple of 32 (clean int8 sublane packing), and shrunk until it fits
    # comfortably under the v7x 32 MiB scoped-VMEM default.
    max_split = max(int(proto_ids_splits[n].shape[0]) for n in names)
    tile = min(tile_n, _round_up(max(max_split, 1), 32))
    tile = max(_round_up(tile, 32), 32)

    def _vmem_est(t):
        io = 2 * t * (P * 4 + 4 + Lpad + Tpad) + 2 * Lpad * 4   # double-buffered in/out
        tmp = 3 * t * (Lpad + Tpad) * 4                          # f32/int32 intermediates
        return io + tmp

    vmem_budget = 24 * 1024 * 1024
    while tile > 64 and _vmem_est(tile) > vmem_budget:
        tile = max(_round_up(tile // 2, 32), 32)

    # Concatenate the three splits along rows, block-aligned per split so each
    # grid block belongs to exactly one split.
    proto_cat, len_cat = [], []
    row_ranges, blk_ranges = {}, {}
    row0, blk0 = 0, 0
    for name in names:
        pids = proto_ids_splits[name].astype(jnp.int32)
        lens = lengths_splits[name].astype(jnp.int32)
        Ns, Ps = pids.shape
        if Ps < P:
            pids = jnp.pad(pids, ((0, 0), (0, P - Ps)), constant_values=-1)
        # Clamp lengths so "mask lanes >= max_len are 1" always holds
        # (text2inp truncates tokens to max_length).
        lens = jnp.clip(lens, 0, max_len)
        nblk = max(pl.cdiv(Ns, tile), 1)
        Ns_pad = nblk * tile
        if Ns_pad != Ns:
            # Padded rows: proto = -1 (never matches -> zero labels, zero freq),
            # length = 0 (mask all 1s). Harmless; consumers ignore rows >= Ns.
            pids = jnp.pad(pids, ((0, Ns_pad - Ns), (0, 0)), constant_values=-1)
            lens = jnp.pad(lens, (0, Ns_pad - Ns), constant_values=0)
        proto_cat.append(pids)
        len_cat.append(lens.reshape(Ns_pad, 1))
        row_ranges[name] = (row0, row0 + Ns_pad, Ns)
        blk_ranges[name] = (blk0, blk0 + nblk)
        row0 += Ns_pad
        blk0 += nblk

    proto_all = jnp.concatenate(proto_cat, axis=0)
    len_all = jnp.concatenate(len_cat, axis=0)
    total_rows, total_blocks = row0, blk0

    cost = pl.CostEstimate(
        flops=total_rows * P * Lpad,                     # compares
        transcendentals=0,
        bytes_accessed=(total_rows * (P * 4 + 4)         # proto + lengths in
                        + total_rows * (Lpad + Tpad)     # labels + mask out (int8)
                        + total_blocks * Lpad * 4))      # freq partials out

    labels, freq_partial, mask = pl.pallas_call(
        fused_encode_kernel,
        out_shape=(
            jax.ShapeDtypeStruct((total_rows, Lpad), jnp.int8),
            jax.ShapeDtypeStruct((total_blocks, 1, Lpad), jnp.float32),
            jax.ShapeDtypeStruct((total_rows, Tpad), jnp.int8),
        ),
        grid_spec=pltpu.PrefetchScalarGridSpec(
            num_scalar_prefetch=0,
            grid=(total_blocks,),
            in_specs=[
                pl.BlockSpec((tile, P), lambda i: (i, 0)),
                pl.BlockSpec((tile, 1), lambda i: (i, 0)),
            ],
            out_specs=[
                pl.BlockSpec((tile, Lpad), lambda i: (i, 0)),
                pl.BlockSpec((1, 1, Lpad), lambda i: (i, 0, 0)),   # per-block freq partial
                pl.BlockSpec((tile, Tpad), lambda i: (i, 0)),
            ],
        ),
        # No resident accumulator -> the grid axis is fully parallel (shards
        # across both TensorCores on v7x; neutral on v5e/v6e).
        compiler_params=pltpu.CompilerParams(
            dimension_semantics=("parallel",)),
        cost_estimate=cost,
    )(proto_all, len_all)

    out = {}
    for name in names:
        r0, r1, Ns = row_ranges[name]
        b0, b1 = blk_ranges[name]
        freq = jnp.sum(freq_partial[b0:b1], axis=(0, 1))   # (Lpad,) f32, tiny reduction
        out[name] = {
            "labels": labels[r0:r1],     # int8 [Ns_pad, Lpad]; lanes >= n_labels are 0
            "mask": mask[r0:r1],         # int8 [Ns_pad, Tpad]; lanes >= max_len are 1
            "label_cnt": freq,           # f32  [Lpad]; per-class instance count
            "num_rows": Ns,              # rows >= Ns are padding; consumers ignore them
        }
    # class_freq in the PyTorch module is computed over the *train* split.
    # TODO(synk): __statistics_dataset counts raw duplicate protocol occurrences
    # per example; this counts per-example presence (clipped labels) — identical
    # unless the same protocol is listed twice within one example's string.
    out["class_freq"] = out["train"]["label_cnt"]
    return out


if __name__ == "__main__":
    # TODO(synk): string tokenization / pandas / DataLoader construction have no
    # Pallas equivalent; examples below start from already-integer protocol ids.
    key = jax.random.PRNGKey(0)
    N = 16          # examples per split
    P = 4           # max protocols listed per example (padded with -1)
    n_labels = 10   # len(p_node)
    max_len = 16    # config.train.max_len

    splits_proto = {}
    splits_len = {}
    for name in ("train", "val", "test"):
        k1, k2, k3, key = jax.random.split(key, 4)
        ids = jax.random.randint(k1, (N, P), 0, n_labels, dtype=jnp.int32)
        # randomly pad out later protocol slots (-1), but keep slot 0 valid so
        # "labels are all zeros" never occurs (matching one_hot_encoder's check).
        drop = jax.random.bernoulli(k2, 0.5, (N, P))
        col = jax.lax.broadcasted_iota(jnp.int32, (N, P), 1)
        proto_ids = jnp.where(jnp.logical_and(drop, col > 0), -1, ids)
        lengths = jax.random.randint(k3, (N,), 1, max_len + 1, dtype=jnp.int32)
        splits_proto[name] = proto_ids
        splits_len[name] = lengths

    result = ems_data_pipeline(splits_proto, splits_len, n_labels, max_len)
    jax.block_until_ready(result)

    # light sanity checks against a pure-JAX reference (slicing here is for
    # verification only — the pipeline itself never re-slices its outputs)
    for name in ("train", "val", "test"):
        ref_labels = jnp.minimum(
            jnp.sum(
                (splits_proto[name][:, :, None]
                 == jnp.arange(n_labels)[None, None, :]).astype(jnp.float32),
                axis=1),
            1.0)
        got_labels = result[name]["labels"][:N, :n_labels].astype(jnp.float32)
        assert jnp.allclose(got_labels, ref_labels), name

        assert jnp.allclose(result[name]["label_cnt"][:n_labels],
                            ref_labels.sum(0)), name
        # padded label lanes must be exactly zero
        assert jnp.all(result[name]["labels"][:, n_labels:] == 0), name

        ref_mask = (jnp.arange(max_len)[None, :]
                    >= splits_len[name][:, None]).astype(jnp.int32)
        got_mask = result[name]["mask"][:N, :max_len].astype(jnp.int32)
        assert jnp.array_equal(got_mask, ref_mask), name
        # padded mask lanes must be 1 (text2inp padding)
        assert jnp.all(result[name]["mask"][:N, max_len:] == 1), name

    assert jnp.allclose(result["class_freq"], result["train"]["label_cnt"])

    print("KERNEL_OK")
</pallas_src>

<mosaic_0001>
module attributes {stable_mosaic.version = 11 : i64} {
  func.func @fused_encode_kernel(%arg0: i32, %arg1: memref<32x4xi32, #tpu.memory_space<vmem>>, %arg2: memref<32x1xi32, #tpu.memory_space<vmem>>, %arg3: memref<32x128xi8, #tpu.memory_space<vmem>>, %arg4: memref<1x1x128xf32, #tpu.memory_space<vmem>>, %arg5: memref<32x128xi8, #tpu.memory_space<vmem>>) attributes {dimension_semantics = [#tpu.dimension_semantics<parallel>], iteration_bounds = array<i64: 3>, scalar_prefetch = 0 : i64, scratch_operands = 0 : i64, tpu.core_type = #tpu.core_type<tc>, window_params = [{transform_indices = @transform_0, window_bounds = array<i64: 32, 4>}, {transform_indices = @transform_1, window_bounds = array<i64: 32, 1>}, {transform_indices = @transform_2, window_bounds = array<i64: 32, 128>}, {transform_indices = @transform_3, window_bounds = array<i64: 1, 1, 128>}, {transform_indices = @transform_4, window_bounds = array<i64: 32, 128>}]} {
    %c0 = arith.constant 0 : index
    %c0_0 = arith.constant 0 : index
    %0 = vector.load %arg1[%c0, %c0_0] : memref<32x4xi32, #tpu.memory_space<vmem>>, vector<32x4xi32>
    %1 = tpu.iota {dimensions = array<i32: 1>} : vector<32x128xi32>
    %2 = vector.extract_strided_slice %0 {offsets = [0, 0], sizes = [32, 1], strides = [1, 1]} : vector<32x4xi32> to vector<32x1xi32>
    %3 = vector.broadcast %2 : vector<32x1xi32> to vector<32x128xi32>
    %4 = arith.cmpi eq, %3, %1 : vector<32x128xi32>
    %5 = vector.extract_strided_slice %0 {offsets = [0, 1], sizes = [32, 1], strides = [1, 1]} : vector<32x4xi32> to vector<32x1xi32>
    %6 = vector.broadcast %5 : vector<32x1xi32> to vector<32x128xi32>
    %7 = arith.cmpi eq, %6, %1 : vector<32x128xi32>
    %8 = arith.ori %4, %7 : vector<32x128xi1>
    %9 = vector.extract_strided_slice %0 {offsets = [0, 2], sizes = [32, 1], strides = [1, 1]} : vector<32x4xi32> to vector<32x1xi32>
    %10 = vector.broadcast %9 : vector<32x1xi32> to vector<32x128xi32>
    %11 = arith.cmpi eq, %10, %1 : vector<32x128xi32>
    %12 = arith.ori %8, %11 : vector<32x128xi1>
    %13 = vector.extract_strided_slice %0 {offsets = [0, 3], sizes = [32, 1], strides = [1, 1]} : vector<32x4xi32> to vector<32x1xi32>
    %14 = vector.broadcast %13 : vector<32x1xi32> to vector<32x128xi32>
    %15 = arith.cmpi eq, %14, %1 : vector<32x128xi32>
    %16 = arith.ori %12, %15 : vector<32x128xi1>
    %17 = arith.extui %16 : vector<32x128xi1> to vector<32x128xi8>
    %c0_1 = arith.constant 0 : index
    %c0_2 = arith.constant 0 : index
    %18 = vector.load %arg3[%c0_1, %c0_2] : memref<32x128xi8, #tpu.memory_space<vmem>>, vector<32x128xi8>
    tpu.vector_store %arg3[%c0_1, %c0_2], %17 {strides = array<i32>} : memref<32x128xi8, #tpu.memory_space<vmem>>, vector<32x128xi8>,
    %19 = arith.extui %16 : vector<32x128xi1> to vector<32x128xi32>
    %20 = arith.sitofp %19 : vector<32x128xi32> to vector<32x128xf32>
    %cst = arith.constant dense<0.000000e+00> : vector<128xf32>
    %21 = vector.multi_reduction <add>, %20, %cst [0] : vector<32x128xf32> to vector<128xf32>
    %22 = vector.shape_cast %21 : vector<128xf32> to vector<1x128xf32>
    %23 = vector.shape_cast %22 : vector<1x128xf32> to vector<1x1x128xf32>
    %c0_3 = arith.constant 0 : index
    %c0_4 = arith.constant 0 : index
    %c0_5 = arith.constant 0 : index
    %24 = vector.load %arg4[%c0_3, %c0_4, %c0_5] : memref<1x1x128xf32, #tpu.memory_space<vmem>>, vector<1x1x128xf32>
    tpu.vector_store %arg4[%c0_3, %c0_4, %c0_5], %23 {strides = array<i32>} : memref<1x1x128xf32, #tpu.memory_space<vmem>>, vector<1x1x128xf32>,
    %25 = tpu.iota {dimensions = array<i32: 1>} : vector<32x128xi32>
    %c0_6 = arith.constant 0 : index
    %c0_7 = arith.constant 0 : index
    %26 = vector.load %arg2[%c0_6, %c0_7] : memref<32x1xi32, #tpu.memory_space<vmem>>, vector<32x1xi32>
    %27 = vector.broadcast %26 : vector<32x1xi32> to vector<32x128xi32>
    %28 = arith.cmpi sge, %25, %27 : vector<32x128xi32>
    %29 = arith.extui %28 : vector<32x128xi1> to vector<32x128xi8>
    %c0_8 = arith.constant 0 : index
    %c0_9 = arith.constant 0 : index
    %30 = vector.load %arg5[%c0_8, %c0_9] : memref<32x128xi8, #tpu.memory_space<vmem>>, vector<32x128xi8>
    tpu.vector_store %arg5[%c0_8, %c0_9], %29 {strides = array<i32>} : memref<32x128xi8, #tpu.memory_space<vmem>>, vector<32x128xi8>,
    return
  }
  func.func @transform_0(%arg0: i32) -> (i32, i32) {
    %c0_i32 = arith.constant 0 : i32
    %c0_i32_0 = arith.constant 0 : i32
    return %arg0, %c0_i32 : i32, i32
  }
  func.func @transform_1(%arg0: i32) -> (i32, i32) {
    %c0_i32 = arith.constant 0 : i32
    %c0_i32_0 = arith.constant 0 : i32
    return %arg0, %c0_i32 : i32, i32
  }
  func.func @transform_2(%arg0: i32) -> (i32, i32) {
    %c0_i32 = arith.constant 0 : i32
    %c0_i32_0 = arith.constant 0 : i32
    return %arg0, %c0_i32 : i32, i32
  }
  func.func @transform_3(%arg0: i32) -> (i32, i32, i32) {
    %c0_i32 = arith.constant 0 : i32
    %c0_i32_0 = arith.constant 0 : i32
    %c0_i32_1 = arith.constant 0 : i32
    return %arg0, %c0_i32, %c0_i32_0 : i32, i32, i32
  }
  func.func @transform_4(%arg0: i32) -> (i32, i32) {
    %c0_i32 = arith.constant 0 : i32
    %c0_i32_0 = arith.constant 0 : i32
    return %arg0, %c0_i32 : i32, i32
  }
}

</mosaic_0001>

<llo_original>
// kernel: tpu_custom_call.1
$region0: #{tpu_custom_call.1}
  #allocation0 [shape = 'u32[]', space=smem, size = 0x4, offset = 0x4, fixed_abs, tag = 'smem constant byte address 0x4 - core index']
  #allocation1 [shape = 'u32[144,128]{1,0:T(1,128)}', space=vmem, size = 0x12000, scoped, tag = 'internal scratch']
  %s0 = inlined_call_operand.vmem [shape: s32[96,4], index: 0, kind: input, shape index: {}]
  %s1 = inlined_call_operand.vmem [shape: s32[96,1], index: 1, kind: input, shape index: {}]
  %s2 = inlined_call_operand.hbm [shape: s8[96,128], index: 2, kind: output, shape index: {0}]
  %s3 = inlined_call_operand.hbm [shape: f32[3,1,128], index: 3, kind: output, shape index: {1}]
  %s4 = inlined_call_operand.hbm [shape: s8[96,128], index: 4, kind: output, shape index: {2}]
  %5 = xla_tuple %s2, %s3, %s4
  %s6 = sld [smem:[#allocation0]]
  $region57: #{tpu_custom_call.1} parent=0
    _
  %s8 = ssub.s32 1, %s6
  %s9 = scalar_select 0, %s8, %s6
  $region1: #{tpu_custom_call.1} parent=0
    #allocation2 [shape = 'u8[8192]{0}', space=vmem, size = 0x2000, scoped, tag = 'output window, operand 0']
    #allocation3 [shape = 's32[2]{0}', space=sflag, size = 0x8, scoped, tag = 'scoped memory for tpu_custom_call.1']
    #allocation4 [shape = 'u8[1024]{0}', space=vmem, size = 0x400, scoped, tag = 'output window, operand 1']
    #allocation5 [shape = 's32[2]{0}', space=sflag, size = 0x8, scoped, tag = 'scoped memory for tpu_custom_call.1']
    #allocation6 [shape = 'u8[8192]{0}', space=vmem, size = 0x2000, scoped, tag = 'output window, operand 2']
    %10 = vsyncpa [#allocation3], 0
    %s11 = scalar_lea.sflag [#allocation3], 1
    %12 = vsyncpa %s11, 0
    %13 = vsyncpa [#allocation5], 0
    %s14 = scalar_lea.sflag [#allocation5], 1
    %15 = vsyncpa %s14, 0
    loop: start=0, step=1, limit=5
    $region2: #{tpu_custom_call.1} parent=1 // loop_pre_header
      _
    $region3: #{tpu_custom_call.1} parent=1 // loop_header
      %s17 = sphi 0, %s21
      %p18 = scmp.ge.s32.totalorder %s17, 5
      %s27 = sphi 0, %s29
      %s30 = sphi 0, %s27
      %s31 = sphi 0, %s30
      %s47 = sphi 0, %s31
      %s53 = sphi 0, %s55
      %s56 = sphi 0, %s53
      %s57 = sphi 0, %s56
      %s73 = sphi 0, %s57
      %s79 = sphi 0, %s81
      %s82 = sphi 0, %s79
      %s83 = sphi 0, %s82
      %s99 = sphi 0, %s83
      %s105 = sphi 0, %s107
      %s108 = sphi 0, %s105
      %s109 = sphi 0, %s108
      %s125 = sphi 0, %s109
      %s131 = sphi 0, %s133
      %s134 = sphi 0, %s131
      %s135 = sphi 0, %s134
      %s151 = sphi 0, %s135
    $region4: #{tpu_custom_call.1} parent=1 // loop_header_branch
      %20 = sbr.rel (%p18) target = $region8
    $region5: #{tpu_custom_call.1} parent=1 // loop_body
      %s22 = ssub.s32 %s17, 1
      %s23 = ssub.s32 %s17, 2
      %s24 = sadd.s32 %s17, 1
      %s25 = ssub.s32 %s17, %s24
      %p26 = scmp.eq.s32.totalorder %s25, 0
      %s28 = sadd.s32 %s27, 1
      %s29 = scalar_select %p26, %s27, %s28
      %p32 = pneg %p26
      %p33 = scmp.eq.s32.totalorder %s17, 2
      %p34 = por %p32, %p33
      %p35 = scmp.ne.s32.totalorder %s27, %s30
      %p36 = scmp.eq.s32.totalorder %s17, 0
      %p37 = por %p35, %p36
      %p38 = scmp.ne.s32.totalorder %s27, %s30
      %p39 = scmp.eq.s32.totalorder %s22, 2
      %p40 = por %p38, %p39
      %p41 = scmp.ne.s32.totalorder %s30, %s31
      %p42 = scmp.eq.s32.totalorder %s22, 0
      %p43 = por %p41, %p42
      %p44 = scmp.ne.s32.totalorder %s30, %s31
      %p45 = scmp.eq.s32.totalorder %s23, 2
      %p46 = por %p44, %p45
      %p48 = scmp.ne.s32.totalorder %s31, %s47
      %p49 = scmp.eq.s32.totalorder %s23, 0
      %p50 = por %p48, %p49
      %s51 = ssub.s32 %s17, %s24
      %p52 = scmp.eq.s32.totalorder %s51, 0
      %s54 = sadd.s32 %s53, 1
      %s55 = scalar_select %p52, %s53, %s54
      %p58 = pneg %p52
      %p59 = scmp.eq.s32.totalorder %s17, 2
      %p60 = por %p58, %p59
      %p61 = scmp.ne.s32.totalorder %s53, %s56
      %p62 = scmp.eq.s32.totalorder %s17, 0
      %p63 = por %p61, %p62
      %p64 = scmp.ne.s32.totalorder %s53, %s56
      %p65 = scmp.eq.s32.totalorder %s22, 2
      %p66 = por %p64, %p65
      %p67 = scmp.ne.s32.totalorder %s56, %s57
      %p68 = scmp.eq.s32.totalorder %s22, 0
      %p69 = por %p67, %p68
      %p70 = scmp.ne.s32.totalorder %s56, %s57
      %p71 = scmp.eq.s32.totalorder %s23, 2
      %p72 = por %p70, %p71
      %p74 = scmp.ne.s32.totalorder %s57, %s73
      %p75 = scmp.eq.s32.totalorder %s23, 0
      %p76 = por %p74, %p75
      %s77 = ssub.s32 %s17, %s24
      %p78 = scmp.eq.s32.totalorder %s77, 0
      %s80 = sadd.s32 %s79, 1
      %s81 = scalar_select %p78, %s79, %s80
      %p84 = pneg %p78
      %p85 = scmp.eq.s32.totalorder %s17, 2
      %p86 = por %p84, %p85
      %p87 = scmp.ne.s32.totalorder %s79, %s82
      %p88 = scmp.eq.s32.totalorder %s17, 0
      %p89 = por %p87, %p88
      %p90 = scmp.ne.s32.totalorder %s79, %s82
      %p91 = scmp.eq.s32.totalorder %s22, 2
      %p92 = por %p90, %p91
      %p93 = scmp.ne.s32.totalorder %s82, %s83
      %p94 = scmp.eq.s32.totalorder %s22, 0
      %p95 = por %p93, %p94
      %p96 = scmp.ne.s32.totalorder %s82, %s83
      %p97 = scmp.eq.s32.totalorder %s23, 2
      %p98 = por %p96, %p97
      %p100 = scmp.ne.s32.totalorder %s83, %s99
      %p101 = scmp.eq.s32.totalorder %s23, 0
      %p102 = por %p100, %p101
      %s103 = ssub.s32 %s17, %s24
      %p104 = scmp.eq.s32.totalorder %s103, 0
      %s106 = sadd.s32 %s105, 1
      %s107 = scalar_select %p104, %s105, %s106
      %p110 = pneg %p104
      %p111 = scmp.eq.s32.totalorder %s17, 2
      %p112 = por %p110, %p111
      %p113 = scmp.ne.s32.totalorder %s105, %s108
      %p114 = scmp.eq.s32.totalorder %s17, 0
      %p115 = por %p113, %p114
      %p116 = scmp.ne.s32.totalorder %s105, %s108
      %p117 = scmp.eq.s32.totalorder %s22, 2
      %p118 = por %p116, %p117
      %p119 = scmp.ne.s32.totalorder %s108, %s109
      %p120 = scmp.eq.s32.totalorder %s22, 0
      %p121 = por %p119, %p120
      %p122 = scmp.ne.s32.totalorder %s108, %s109
      %p123 = scmp.eq.s32.totalorder %s23, 2
      %p124 = por %p122, %p123
      %p126 = scmp.ne.s32.totalorder %s109, %s125
      %p127 = scmp.eq.s32.totalorder %s23, 0
      %p128 = por %p126, %p127
      %s129 = ssub.s32 %s17, %s24
      %p130 = scmp.eq.s32.totalorder %s129, 0
      %s132 = sadd.s32 %s131, 1
      %s133 = scalar_select %p130, %s131, %s132
      %p136 = pneg %p130
      %p137 = scmp.eq.s32.totalorder %s17, 2
      %p138 = por %p136, %p137
      %p139 = scmp.ne.s32.totalorder %s131, %s134
      %p140 = scmp.eq.s32.totalorder %s17, 0
      %p141 = por %p139, %p140
      %p142 = scmp.ne.s32.totalorder %s131, %s134
      %p143 = scmp.eq.s32.totalorder %s22, 2
      %p144 = por %p142, %p143
      %p145 = scmp.ne.s32.totalorder %s134, %s135
      %p146 = scmp.eq.s32.totalorder %s22, 0
      %p147 = por %p145, %p146
      %p148 = scmp.ne.s32.totalorder %s134, %s135
      %p149 = scmp.eq.s32.totalorder %s23, 2
      %p150 = por %p148, %p149
      %p152 = scmp.ne.s32.totalorder %s135, %s151
      %p153 = scmp.eq.s32.totalorder %s23, 0
      %p154 = por %p152, %p153
      %p155 = scmp.le.s32.totalorder 1, %s17
      %p156 = scmp.lt.s32.totalorder %s17, 4
      %p157 = pnand %p155, %p156
      %p158 = pneg %p157
      // Predicated region
      $region9: #{tpu_custom_call.1} parent=5 // pred_check
        _
      $region10: #{tpu_custom_call.1} parent=5 // pred_check_branch
        %160 = sbr.rel (%p157) target = $region12
      $region11: #{tpu_custom_call.1} parent=5 // pred_region
        %s161 = ssub.s32 %s17, 1
      $region12: #{tpu_custom_call.1} parent=5 // pred_fallthru
        _
      %p162 = scmp.lt.s32.totalorder %s17, 3
      // Predicated region
      $region13: #{tpu_custom_call.1} parent=5 // pred_check
        %p163 = pneg %p162
      $region14: #{tpu_custom_call.1} parent=5 // pred_check_branch
        %165 = sbr.rel (%p163) target = $region16
      $region15: #{tpu_custom_call.1} parent=5 // pred_region
        // Predicated region
        $region17: #{tpu_custom_call.1} parent=15 // pred_check
          %p166 = pneg %p37
        $region18: #{tpu_custom_call.1} parent=15 // pred_check_branch
          %168 = sbr.rel (%p166) target = $region20
        $region19: #{tpu_custom_call.1} parent=15 // pred_region
          %s169 = smul.u32 4, %s17
          %p170 = scmp.lt.s32.totalorder %s169, 11
          %s171 = scalar_select %p170, %s169, 11
          %s172 = smul.addr %s171, 8
          %s173 = scalar_lea.vmem %s0, %s172
          %s174 = smul.u32 4, %s17
        $region20: #{tpu_custom_call.1} parent=15 // pred_fallthru
          _
        // Predicated region
        $region21: #{tpu_custom_call.1} parent=15 // pred_check
          %p175 = pneg %p63
        $region22: #{tpu_custom_call.1} parent=15 // pred_check_branch
          %177 = sbr.rel (%p175) target = $region24
        $region23: #{tpu_custom_call.1} parent=15 // pred_region
          %s178 = smul.u32 4, %s17
          %p179 = scmp.lt.s32.totalorder %s178, 11
          %s180 = scalar_select %p179, %s178, 11
          %s181 = smul.addr %s180, 8
          %s182 = scalar_lea.vmem %s1, %s181
          %s183 = smul.u32 4, %s17
        $region24: #{tpu_custom_call.1} parent=15 // pred_fallthru
          _
      $region16: #{tpu_custom_call.1} parent=5 // pred_fallthru
        _
      %p184 = scmp.le.s32.totalorder 1, %s17
      %p185 = scmp.lt.s32.totalorder %s17, 4
      %p186 = pnand %p184, %p185
      %p187 = pneg %p186
      // Predicated region
      $region25: #{tpu_custom_call.1} parent=5 // pred_check
        _
      $region26: #{tpu_custom_call.1} parent=5 // pred_check_branch
        %189 = sbr.rel (%p186) target = $region28
      $region27: #{tpu_custom_call.1} parent=5 // pred_region
        %s190 = ssub.s32 %s17, 1
        %s191 = smul.u32 4, %s22
        %p192 = scmp.lt.s32.totalorder %s191, 11
        %s193 = scalar_select %p192, %s191, 11
        %s194 = smul.addr %s193, 8
        %s195 = scalar_lea.vmem %s0, %s194
        %p196 = pneg %p43
        %p197 = pneg %p40
        %s198 = smul.u32 4, %s22
        %p199 = scmp.lt.s32.totalorder %s198, 11
        %s200 = scalar_select %p199, %s198, 11
        %s201 = smul.addr %s200, 8
        %s202 = scalar_lea.vmem %s1, %s201
        %p203 = pneg %p69
        %p204 = pneg %p66
        %p205 = pneg %p95
        %p206 = pneg %p92
        %s207 = sand.u32 %s82, 1
        %s208 = scalar_lea.sflag [#allocation3], %s207
        %s209 = sand.u32 %s82, 1
        %s210 = smul.addr %s209, 8
        %s211 = scalar_lea.vmem [#allocation2], %s210
        %p212 = pneg %p121
        %p213 = pneg %p118
        %s214 = sand.u32 %s22, 1
        %s215 = scalar_lea.sflag [#allocation5], %s214
        %s216 = sand.u32 %s108, 1
        %s217 = scalar_lea.vmem [#allocation4], %s216
        %p218 = pneg %p147
        %p219 = pneg %p144
        %s220 = sand.u32 %s22, 1
        %s221 = scalar_lea.sflag [#allocation5], %s220
        %s222 = sand.u32 %s134, 1
        %s223 = smul.addr %s222, 8
        %s224 = scalar_lea.vmem [#allocation6], %s223
        %s225 = smul.u32 4, %s22
        %p226 = scmp.lt.s32.totalorder %s225, 11
        %s227 = scalar_select %p226, %s225, 11
        %s228 = smul.addr %s227, 8
        %s229 = scalar_lea.vmem %s0, %s228
        %s230 = smul.u32 4, %s22
        %s231 = smul.u32 4, %s22
        %p232 = scmp.lt.s32.totalorder %s231, 11
        %s233 = scalar_select %p232, %s231, 11
        %s234 = smul.addr %s233, 8
        %s235 = scalar_lea.vmem %s1, %s234
        %s236 = smul.u32 4, %s22
        %v239 = vld [vmem:[%s229] sm:$0xff]
        %v240 = vld [vmem:[%s229 + $0x8] sm:$0xff]
        %v241 = vld [vmem:[%s229 + $0x10] sm:$0xff]
        %v242 = vld [vmem:[%s229 + $0x18] sm:$0xff]
        %v243 = vlaneseq
        %v244 = vand.u32 %v243, 127
        %245 = vset.pattern.permute.xlu0 0
        %246 = vperm.xlu0 %245, %v239
        %v247 = vpop.permute.xlu0 %246
        %248 = vset.pattern.permute.xlu0 0
        %249 = vperm.xlu0 %248, %v240
        %v250 = vpop.permute.xlu0 %249
        %251 = vset.pattern.permute.xlu0 0
        %252 = vperm.xlu0 %251, %v241
        %v253 = vpop.permute.xlu0 %252
        %254 = vset.pattern.permute.xlu0 0
        %255 = vperm.xlu0 %254, %v242
        %v256 = vpop.permute.xlu0 %255
        %vm257 = vcmp.eq.s32.totalorder %v247, %v244
        %vm258 = vcmp.eq.s32.totalorder %v250, %v244
        %vm259 = vcmp.eq.s32.totalorder %v253, %v244
        %vm260 = vcmp.eq.s32.totalorder %v256, %v244
        %261 = vset.pattern.permute.xlu0 1
        %262 = vperm.xlu0 %261, %v239
        %v263 = vpop.permute.xlu0 %262
        %264 = vset.pattern.permute.xlu0 1
        %265 = vperm.xlu0 %264, %v240
        %v266 = vpop.permute.xlu0 %265
        %267 = vset.pattern.permute.xlu0 1
        %268 = vperm.xlu0 %267, %v241
        %v269 = vpop.permute.xlu0 %268
        %270 = vset.pattern.permute.xlu0 1
        %271 = vperm.xlu0 %270, %v242
        %v272 = vpop.permute.xlu0 %271
        %vm273 = vcmp.eq.s32.totalorder %v263, %v244
        %vm274 = vcmp.eq.s32.totalorder %v266, %v244
        %vm275 = vcmp.eq.s32.totalorder %v269, %v244
        %vm276 = vcmp.eq.s32.totalorder %v272, %v244
        %vm277 = vmor %vm257, %vm273
        %vm278 = vmor %vm258, %vm274
        %vm279 = vmor %vm259, %vm275
        %vm280 = vmor %vm260, %vm276
        %281 = vset.pattern.permute.xlu0 2
        %282 = vperm.xlu0 %281, %v239
        %v283 = vpop.permute.xlu0 %282
        %284 = vset.pattern.permute.xlu0 2
        %285 = vperm.xlu0 %284, %v240
        %v286 = vpop.permute.xlu0 %285
        %287 = vset.pattern.permute.xlu0 2
        %288 = vperm.xlu0 %287, %v241
        %v289 = vpop.permute.xlu0 %288
        %290 = vset.pattern.permute.xlu0 2
        %291 = vperm.xlu0 %290, %v242
        %v292 = vpop.permute.xlu0 %291
        %vm293 = vcmp.eq.s32.totalorder %v283, %v244
        %vm294 = vcmp.eq.s32.totalorder %v286, %v244
        %vm295 = vcmp.eq.s32.totalorder %v289, %v244
        %vm296 = vcmp.eq.s32.totalorder %v292, %v244
        %vm297 = vmor %vm277, %vm293
        %vm298 = vmor %vm278, %vm294
        %vm299 = vmor %vm279, %vm295
        %vm300 = vmor %vm280, %vm296
        %301 = vset.pattern.permute.xlu0 3
        %302 = vperm.xlu0 %301, %v239
        %v303 = vpop.permute.xlu0 %302
        %304 = vset.pattern.permute.xlu0 3
        %305 = vperm.xlu0 %304, %v240
        %v306 = vpop.permute.xlu0 %305
        %307 = vset.pattern.permute.xlu0 3
        %308 = vperm.xlu0 %307, %v241
        %v309 = vpop.permute.xlu0 %308
        %310 = vset.pattern.permute.xlu0 3
        %311 = vperm.xlu0 %310, %v242
        %v312 = vpop.permute.xlu0 %311
        %vm313 = vcmp.eq.s32.totalorder %v303, %v244
        %vm314 = vcmp.eq.s32.totalorder %v306, %v244
        %vm315 = vcmp.eq.s32.totalorder %v309, %v244
        %vm316 = vcmp.eq.s32.totalorder %v312, %v244
        %vm317 = vmor %vm297, %vm313
        %vm318 = vmor %vm298, %vm314
        %vm319 = vmor %vm299, %vm315
        %vm320 = vmor %vm300, %vm316
        %vm321 = vmpackc.low %vm318, %vm317
        %vm322 = vmpackc.low %vm320, %vm319
        %vm323 = vmpackc.even %vm322, %vm321
        %v324 = vsel %vm323, 16843009, 0
        %325 = vst [vmem:[%s211] sm:$0xff] %v324
        %v326 = vsel %vm317, 1, 0
        %v327 = vsel %vm318, 1, 0
        %v328 = vsel %vm319, 1, 0
        %v329 = vsel %vm320, 1, 0
        %v330 = vcvt.s32.f32 %v326
        %v331 = vcvt.s32.f32 %v327
        %v332 = vcvt.s32.f32 %v328
        %v333 = vcvt.s32.f32 %v329
        %v334 = vadd.f32 %v330, %v331
        %v335 = vadd.f32 %v334, %v332
        %v336 = vadd.f32 %v335, %v333
        %v337 = vrot.slane %v336, 4
        %v338 = vadd.f32 %v336, %v337
        %v339 = vrot.slane %v338, 2
        %v340 = vadd.f32 %v338, %v339
        %v341 = vrot.slane %v340, 1
        %v342 = vadd.f32 %v340, %v341
        %343 = vst [vmem:[%s217] sm:$0x1] %v342
        %v344 = vld [vmem:[%s235] sm:$0xff]
        %v345 = vld [vmem:[%s235 + $0x8] sm:$0xff]
        %v346 = vld [vmem:[%s235 + $0x10] sm:$0xff]
        %v347 = vld [vmem:[%s235 + $0x18] sm:$0xff]
        %348 = vset.pattern.permute.xlu0 0
        %349 = vperm.xlu0 %348, %v344
        %v350 = vpop.permute.xlu0 %349
        %351 = vset.pattern.permute.xlu0 0
        %352 = vperm.xlu0 %351, %v345
        %v353 = vpop.permute.xlu0 %352
        %354 = vset.pattern.permute.xlu0 0
        %355 = vperm.xlu0 %354, %v346
        %v356 = vpop.permute.xlu0 %355
        %357 = vset.pattern.permute.xlu0 0
        %358 = vperm.xlu0 %357, %v347
        %v359 = vpop.permute.xlu0 %358
        %vm360 = vcmp.ge.s32.totalorder %v244, %v350
        %vm361 = vcmp.ge.s32.totalorder %v244, %v353
        %vm362 = vcmp.ge.s32.totalorder %v244, %v356
        %vm363 = vcmp.ge.s32.totalorder %v244, %v359
        %vm364 = vmpackc.low %vm361, %vm360
        %vm365 = vmpackc.low %vm363, %vm362
        %vm366 = vmpackc.even %vm365, %vm364
        %v367 = vsel %vm366, 16843009, 0
        %368 = vst [vmem:[%s224] sm:$0xff] %v367
        %s369 = sand.u32 %s82, 1
        %s370 = scalar_lea.sflag [#allocation3], %s369
        %s371 = sand.u32 %s82, 1
        %s372 = smul.addr %s371, 8
        %s373 = scalar_lea.vmem [#allocation2], %s372
        %s374 = sand.u32 %s22, 1
        %s375 = scalar_lea.sflag [#allocation5], %s374
        %s376 = sand.u32 %s108, 1
        %s377 = scalar_lea.vmem [#allocation4], %s376
        %s378 = sand.u32 %s22, 1
        %s379 = scalar_lea.sflag [#allocation5], %s378
        %s380 = sand.u32 %s134, 1
        %s381 = smul.addr %s380, 8
        %s382 = scalar_lea.vmem [#allocation6], %s381
        // Predicated region
        $region29: #{tpu_custom_call.1} parent=27 // pred_check
          %p383 = pneg %p92
        $region30: #{tpu_custom_call.1} parent=27 // pred_check_branch
          %385 = sbr.rel (%p383) target = $region32
        $region31: #{tpu_custom_call.1} parent=27 // pred_region
          %s387 = ssub.s32 128, 128
          %388 = vsyncadd %s370, %s387
          %s389 = smul.addr %s22, 128
          %s390 = scalar_lea.hbm %s2, %s389
          %s392 = sshll.u32 %s373, 4
          %s393 = int_to_ptr.vmem [resolvable:$true] %s392
          %395 = dma.vmem_to_hbm [thread:$0]  %s393, 128, %s390, %s370
        $region32: #{tpu_custom_call.1} parent=27 // pred_fallthru
          _
        // Predicated region
        $region33: #{tpu_custom_call.1} parent=27 // pred_check
          %p396 = pneg %p118
        $region34: #{tpu_custom_call.1} parent=27 // pred_check_branch
          %398 = sbr.rel (%p396) target = $region36
        $region35: #{tpu_custom_call.1} parent=27 // pred_region
          %s400 = ssub.s32 16, 16
          %401 = vsyncadd %s375, %s400
          %s402 = smul.addr %s22, 16
          %s403 = scalar_lea.hbm %s3, %s402
          %s405 = sshll.u32 %s377, 4
          %s406 = int_to_ptr.vmem [resolvable:$true] %s405
          %408 = dma.vmem_to_hbm [thread:$0]  %s406, 16, %s403, %s375
        $region36: #{tpu_custom_call.1} parent=27 // pred_fallthru
          _
        // Predicated region
        $region37: #{tpu_custom_call.1} parent=27 // pred_check
          %p409 = pneg %p144
        $region38: #{tpu_custom_call.1} parent=27 // pred_check_branch
          %411 = sbr.rel (%p409) target = $region40
        $region39: #{tpu_custom_call.1} parent=27 // pred_region
          %s413 = ssub.s32 128, 128
          %414 = vsyncadd %s379, %s413
          %s415 = smul.addr %s22, 128
          %s416 = scalar_lea.hbm %s4, %s415
          %s418 = sshll.u32 %s382, 4
          %s419 = int_to_ptr.vmem [resolvable:$true] %s418
          %421 = dma.vmem_to_hbm [thread:$0]  %s419, 128, %s416, %s379
        $region40: #{tpu_custom_call.1} parent=27 // pred_fallthru
          _
      $region28: #{tpu_custom_call.1} parent=5 // pred_fallthru
        _
      %p422 = scmp.le.s32.totalorder 2, %s17
      // Predicated region
      $region41: #{tpu_custom_call.1} parent=5 // pred_check
        %p423 = pneg %p422
      $region42: #{tpu_custom_call.1} parent=5 // pred_check_branch
        %425 = sbr.rel (%p423) target = $region44
      $region43: #{tpu_custom_call.1} parent=5 // pred_region
        %s426 = ssub.s32 %s17, 2
        // Predicated region
        $region45: #{tpu_custom_call.1} parent=43 // pred_check
          %p427 = pneg %p98
        $region46: #{tpu_custom_call.1} parent=43 // pred_check_branch
          %429 = sbr.rel (%p427) target = $region48
        $region47: #{tpu_custom_call.1} parent=43 // pred_region
          %s430 = sand.u32 %s83, 1
          %s431 = scalar_lea.sflag [#allocation3], %s430
          %s432 = sand.u32 %s83, 1
          %s433 = smul.addr %s432, 8
          %s434 = scalar_lea.vmem [#allocation2], %s433
          %435 = dma.done %s431, 128
        $region48: #{tpu_custom_call.1} parent=43 // pred_fallthru
          _
        // Predicated region
        $region49: #{tpu_custom_call.1} parent=43 // pred_check
          %p436 = pneg %p124
        $region50: #{tpu_custom_call.1} parent=43 // pred_check_branch
          %438 = sbr.rel (%p436) target = $region52
        $region51: #{tpu_custom_call.1} parent=43 // pred_region
          %s439 = sand.u32 %s23, 1
          %s440 = scalar_lea.sflag [#allocation5], %s439
          %s441 = sand.u32 %s109, 1
          %s442 = scalar_lea.vmem [#allocation4], %s441
          %443 = dma.done %s440, 16
        $region52: #{tpu_custom_call.1} parent=43 // pred_fallthru
          _
        // Predicated region
        $region53: #{tpu_custom_call.1} parent=43 // pred_check
          %p444 = pneg %p150
        $region54: #{tpu_custom_call.1} parent=43 // pred_check_branch
          %446 = sbr.rel (%p444) target = $region56
        $region55: #{tpu_custom_call.1} parent=43 // pred_region
          %s447 = sand.u32 %s23, 1
          %s448 = scalar_lea.sflag [#allocation5], %s447
          %s449 = sand.u32 %s135, 1
          %s450 = smul.addr %s449, 8
          %s451 = scalar_lea.vmem [#allocation6], %s450
          %452 = dma.done %s448, 128
        $region56: #{tpu_custom_call.1} parent=43 // pred_fallthru
          _
      $region44: #{tpu_custom_call.1} parent=5 // pred_fallthru
        _
    $region6: #{tpu_custom_call.1} parent=1 // loop_footer
      %s21 = sadd.s32 1, %s17
    $region7: #{tpu_custom_call.1} parent=1 // loop_footer_branch
      %16 = sbr.rel target = $region3
    $region8: #{tpu_custom_call.1} parent=1 // loop_exit
      _
    %453 = vsyncpa [#allocation3], 1
    %s454 = scalar_lea.sflag [#allocation3], 1
    %455 = vsyncpa %s454, 1
    %456 = vsyncpa [#allocation5], 1
    %s457 = scalar_lea.sflag [#allocation5], 1
    %458 = vsyncpa %s457, 1

</llo_original>
